<compile_context>
chip_gen: v6e
topology: v6e:2x2x1
jax: 0.10.0
libtpu: 0.0.40
codegen_flags: <defaults>
</compile_context>

<pallas_src>
import jax
import jax.numpy as jnp
from jax.experimental import pallas as pl
from jax.experimental.pallas import tpu as pltpu

BN_EPS = 1e-5


def _transition_kernel(x_ref, ss_ref, w_ref, pool_ref, o_ref):
    # x_ref:    (N, Cin, H*W)        flat spatial on the lane axis (lane-dense)
    # ss_ref:   (2, Cin, 1)          BN scale / shift (precomputed in wrapper)
    # w_ref:    (Cout, Cin)          1x1 conv weight
    # pool_ref: (H*W, Hout*Wout)     constant 2x2 avg-pool matrix (entries 0 / 0.25)
    # o_ref:    (Cout, N*Hout*Wout)  lane-dense output slab
    n_imgs = x_ref.shape[0]

    x = x_ref[...]                                   # (N, Cin, HW)
    scale = ss_ref[0][None]                          # (1, Cin, 1) - sublane-aligned bcast
    shift = ss_ref[1][None]

    # BatchNorm (folded affine) + ReLU: pure VPU, full 128-lane occupancy.
    h = jnp.maximum(x * scale + shift, 0.0)          # (N, Cin, HW)

    w = w_ref[...]                                   # (Cout, Cin)
    pmat = pool_ref[...]                             # (HW, HoutWout)

    outs = []
    for n in range(n_imgs):                          # static unroll; batch is tiny & resident
        # 1x1 conv == channel contraction (MXU), then 2x2 avg-pool as a matmul (MXU).
        y = jnp.dot(w, h[n], preferred_element_type=jnp.float32)        # (Cout, HW)
        outs.append(jnp.dot(y, pmat, preferred_element_type=jnp.float32))  # (Cout, HoutWout)

    # Single lane-dense store (last dim = N*Hout*Wout, a multiple of 128 here).
    o_ref[...] = jnp.concatenate(outs, axis=-1).astype(o_ref.dtype)


def transition_layer(x_nchw, gamma, beta, run_mean, run_var, w_oc_ic):
    """x_nchw: (N, Cin, H, W) f32; w_oc_ic: (Cout, Cin) from Conv2d weight (Cout,Cin,1,1)."""
    N, Cin, H, W = x_nchw.shape
    Cout = w_oc_ic.shape[0]
    assert H % 2 == 0 and W % 2 == 0
    Hout, Wout = H // 2, W // 2
    HW, HWout = H * W, Hout * Wout

    # Fold BN (inference) into a single per-channel scale/shift, once, outside the kernel.
    scale = gamma * jax.lax.rsqrt(run_var + BN_EPS)
    shift = beta - run_mean * scale
    ss = jnp.stack([scale, shift], axis=0).reshape(2, Cin, 1)

    # Constant 2x2 average-pool matrix: P[s, p] = 0.25 if source pixel s maps to pooled p.
    hh = jnp.arange(HW, dtype=jnp.int32) // W
    ww = jnp.arange(HW, dtype=jnp.int32) % W
    dst = (hh // 2) * Wout + (ww // 2)                                   # (HW,)
    pool_mat = (dst[:, None] == jnp.arange(HWout, dtype=jnp.int32)[None, :]
                ).astype(jnp.float32) * 0.25                             # (HW, HWout)

    # Contiguous reshape only (no transpose): NCHW -> (N, Cin, H*W).
    x_flat = x_nchw.reshape(N, Cin, HW)

    out_flat = pl.pallas_call(
        _transition_kernel,
        out_shape=jax.ShapeDtypeStruct((Cout, N * HWout), jnp.float32),
        grid_spec=pltpu.PrefetchScalarGridSpec(
            num_scalar_prefetch=0,
            grid=(1,),                                  # whole problem fits in one VMEM block
            in_specs=[
                pl.BlockSpec((N, Cin, HW), lambda i: (0, 0, 0)),
                pl.BlockSpec((2, Cin, 1), lambda i: (0, 0, 0)),
                pl.BlockSpec((Cout, Cin), lambda i: (0, 0)),
                pl.BlockSpec((HW, HWout), lambda i: (0, 0)),
            ],
            out_specs=pl.BlockSpec((Cout, N * HWout), lambda i: (0, 0)),
        ),
        compiler_params=pltpu.CompilerParams(dimension_semantics=("arbitrary",)),
    )(x_flat, ss, w_oc_ic, pool_mat)

    # Layout plumbing back to NCHW (tiny; handled by XLA).
    out = out_flat.reshape(Cout, N, Hout, Wout).transpose(1, 0, 2, 3)
    return out


def _reference(x_nchw, gamma, beta, run_mean, run_var, w_oc_ic):
    # Pure-JAX reference of the same semantics (NCHW).
    scale = gamma * jax.lax.rsqrt(run_var + BN_EPS)
    shift = beta - run_mean * scale
    h = jnp.maximum(x_nchw * scale[None, :, None, None] + shift[None, :, None, None], 0.0)
    y = jnp.einsum("nchw,oc->nohw", h, w_oc_ic)
    p = (y[:, :, 0::2, 0::2] + y[:, :, 1::2, 0::2] +
         y[:, :, 0::2, 1::2] + y[:, :, 1::2, 1::2]) * 0.25
    return p


if __name__ == "__main__":
    # Module config: TransitionLayer(theta=0.5, m=8) -> Cout = int(0.5 * 8) = 4
    theta, m = 0.5, 8
    cout = int(theta * m)
    N, H, W = 2, 16, 16

    key = jax.random.PRNGKey(0)
    kx, kg, kb, km, kv, kw = jax.random.split(key, 6)

    x = jax.random.normal(kx, (N, m, H, W), dtype=jnp.float32)
    gamma = 1.0 + 0.1 * jax.random.normal(kg, (m,), dtype=jnp.float32)
    beta = 0.1 * jax.random.normal(kb, (m,), dtype=jnp.float32)
    run_mean = 0.1 * jax.random.normal(km, (m,), dtype=jnp.float32)
    run_var = jnp.abs(jax.random.normal(kv, (m,), dtype=jnp.float32)) + 0.5
    w = jax.random.normal(kw, (cout, m), dtype=jnp.float32) * 0.1   # Conv2d (Cout,Cin,1,1) squeezed

    out = transition_layer(x, gamma, beta, run_mean, run_var, w)
    out = jax.block_until_ready(out)

    ref = _reference(x, gamma, beta, run_mean, run_var, w)
    assert out.shape == (N, cout, H // 2, W // 2), out.shape
    assert jnp.allclose(out, ref, atol=1e-4, rtol=1e-4), float(jnp.max(jnp.abs(out - ref)))

    print("KERNEL_OK")
</pallas_src>

<mosaic_0001>
module attributes {stable_mosaic.version = 11 : i64} {
  func.func @_transition_kernel(%arg0: i32, %arg1: memref<2x8x256xf32, #tpu.memory_space<vmem>>, %arg2: memref<2x8x1xf32, #tpu.memory_space<vmem>>, %arg3: memref<4x8xf32, #tpu.memory_space<vmem>>, %arg4: memref<256x64xf32, #tpu.memory_space<vmem>>, %arg5: memref<4x128xf32, #tpu.memory_space<vmem>>) attributes {dimension_semantics = [#tpu.dimension_semantics<arbitrary>], iteration_bounds = array<i64: 1>, scalar_prefetch = 0 : i64, scratch_operands = 0 : i64, tpu.core_type = #tpu.core_type<tc>, window_params = [{pipeline_mode = #tpu.pipeline_mode<synchronous>, transform_indices = @transform_0, window_bounds = array<i64: 2, 8, 256>}, {pipeline_mode = #tpu.pipeline_mode<synchronous>, transform_indices = @transform_1, window_bounds = array<i64: 2, 8, 1>}, {pipeline_mode = #tpu.pipeline_mode<synchronous>, transform_indices = @transform_2, window_bounds = array<i64: 4, 8>}, {pipeline_mode = #tpu.pipeline_mode<synchronous>, transform_indices = @transform_3, window_bounds = array<i64: 256, 64>}, {pipeline_mode = #tpu.pipeline_mode<synchronous>, transform_indices = @transform_4, window_bounds = array<i64: 4, 128>}]} {
    %c0 = arith.constant 0 : index
    %c0_0 = arith.constant 0 : index
    %c0_1 = arith.constant 0 : index
    %0 = vector.load %arg1[%c0, %c0_0, %c0_1] : memref<2x8x256xf32, #tpu.memory_space<vmem>>, vector<2x8x256xf32>
    %c0_2 = arith.constant 0 : index
    %c0_3 = arith.constant 0 : index
    %c0_4 = arith.constant 0 : index
    %1 = vector.load %arg2[%c0_2, %c0_3, %c0_4] : memref<2x8x1xf32, #tpu.memory_space<vmem>>, vector<1x8x1xf32>
    %2 = vector.shape_cast %1 : vector<1x8x1xf32> to vector<8x1xf32>
    %3 = vector.shape_cast %2 : vector<8x1xf32> to vector<1x8x1xf32>
    %c1 = arith.constant 1 : index
    %c0_5 = arith.constant 0 : index
    %c0_6 = arith.constant 0 : index
    %4 = vector.load %arg2[%c1, %c0_5, %c0_6] : memref<2x8x1xf32, #tpu.memory_space<vmem>>, vector<1x8x1xf32>
    %5 = vector.shape_cast %4 : vector<1x8x1xf32> to vector<8x1xf32>
    %6 = vector.shape_cast %5 : vector<8x1xf32> to vector<1x8x1xf32>
    %7 = vector.broadcast %3 : vector<1x8x1xf32> to vector<2x8x256xf32>
    %8 = arith.mulf %0, %7 : vector<2x8x256xf32>
    %9 = vector.broadcast %6 : vector<1x8x1xf32> to vector<2x8x256xf32>
    %10 = arith.addf %8, %9 : vector<2x8x256xf32>
    %cst = arith.constant 0.000000e+00 : f32
    %11 = vector.broadcast %cst : f32 to vector<2x8x256xf32>
    %12 = arith.maximumf %10, %11 : vector<2x8x256xf32>
    %c0_7 = arith.constant 0 : index
    %c0_8 = arith.constant 0 : index
    %13 = vector.load %arg3[%c0_7, %c0_8] : memref<4x8xf32, #tpu.memory_space<vmem>>, vector<4x8xf32>
    %c0_9 = arith.constant 0 : index
    %c0_10 = arith.constant 0 : index
    %14 = vector.load %arg4[%c0_9, %c0_10] : memref<256x64xf32, #tpu.memory_space<vmem>>, vector<256x64xf32>
    %15 = vector.extract_strided_slice %12 {offsets = [0, 0, 0], sizes = [1, 8, 256], strides = [1, 1, 1]} : vector<2x8x256xf32> to vector<1x8x256xf32>
    %16 = vector.shape_cast %15 : vector<1x8x256xf32> to vector<8x256xf32>
    %cst_11 = arith.constant dense<0.000000e+00> : vector<4x256xf32>
    %17 = tpu.matmul %13, %16, %cst_11 {dimension_numbers = #tpu.dot_dimension_numbers<[1], [0], [0], [1], [0, 0, 1, 1], [], []>} : vector<4x8xf32>, vector<8x256xf32>, vector<4x256xf32> -> vector<4x256xf32>
    %cst_12 = arith.constant dense<0.000000e+00> : vector<4x64xf32>
    %18 = tpu.matmul %17, %14, %cst_12 {dimension_numbers = #tpu.dot_dimension_numbers<[1], [0], [0], [1], [0, 0, 1, 1], [], []>} : vector<4x256xf32>, vector<256x64xf32>, vector<4x64xf32> -> vector<4x64xf32>
    %19 = vector.extract_strided_slice %12 {offsets = [1, 0, 0], sizes = [1, 8, 256], strides = [1, 1, 1]} : vector<2x8x256xf32> to vector<1x8x256xf32>
    %20 = vector.shape_cast %19 : vector<1x8x256xf32> to vector<8x256xf32>
    %cst_13 = arith.constant dense<0.000000e+00> : vector<4x256xf32>
    %21 = tpu.matmul %13, %20, %cst_13 {dimension_numbers = #tpu.dot_dimension_numbers<[1], [0], [0], [1], [0, 0, 1, 1], [], []>} : vector<4x8xf32>, vector<8x256xf32>, vector<4x256xf32> -> vector<4x256xf32>
    %cst_14 = arith.constant dense<0.000000e+00> : vector<4x64xf32>
    %22 = tpu.matmul %21, %14, %cst_14 {dimension_numbers = #tpu.dot_dimension_numbers<[1], [0], [0], [1], [0, 0, 1, 1], [], []>} : vector<4x256xf32>, vector<256x64xf32>, vector<4x64xf32> -> vector<4x64xf32>
    %23 = tpu.concatenate %18, %22 in 1 : vector<4x64xf32>, vector<4x64xf32> -> vector<4x128xf32>
    %c0_15 = arith.constant 0 : index
    %c0_16 = arith.constant 0 : index
    %24 = vector.load %arg5[%c0_15, %c0_16] : memref<4x128xf32, #tpu.memory_space<vmem>>, vector<4x128xf32>
    tpu.vector_store %arg5[%c0_15, %c0_16], %23 {strides = array<i32>} : memref<4x128xf32, #tpu.memory_space<vmem>>, vector<4x128xf32>,
    return
  }
  func.func @transform_0(%arg0: i32) -> (i32, i32, i32) {
    %c0_i32 = arith.constant 0 : i32
    %c0_i32_0 = arith.constant 0 : i32
    %c0_i32_1 = arith.constant 0 : i32
    %c0_i32_2 = arith.constant 0 : i32
    return %c0_i32, %c0_i32_0, %c0_i32_1 : i32, i32, i32
  }
  func.func @transform_1(%arg0: i32) -> (i32, i32, i32) {
    %c0_i32 = arith.constant 0 : i32
    %c0_i32_0 = arith.constant 0 : i32
    %c0_i32_1 = arith.constant 0 : i32
    %c0_i32_2 = arith.constant 0 : i32
    return %c0_i32, %c0_i32_0, %c0_i32_1 : i32, i32, i32
  }
  func.func @transform_2(%arg0: i32) -> (i32, i32) {
    %c0_i32 = arith.constant 0 : i32
    %c0_i32_0 = arith.constant 0 : i32
    %c0_i32_1 = arith.constant 0 : i32
    return %c0_i32, %c0_i32_0 : i32, i32
  }
  func.func @transform_3(%arg0: i32) -> (i32, i32) {
    %c0_i32 = arith.constant 0 : i32
    %c0_i32_0 = arith.constant 0 : i32
    %c0_i32_1 = arith.constant 0 : i32
    return %c0_i32, %c0_i32_0 : i32, i32
  }
  func.func @transform_4(%arg0: i32) -> (i32, i32) {
    %c0_i32 = arith.constant 0 : i32
    %c0_i32_0 = arith.constant 0 : i32
    %c0_i32_1 = arith.constant 0 : i32
    return %c0_i32, %c0_i32_0 : i32, i32
  }
}

</mosaic_0001>

<llo_original>
// kernel: tpu_custom_call.1
$region0: #{tpu_custom_call.1}
  #allocation0 [shape = 'u32[]', space=smem, size = 0x4, offset = 0x4, fixed_abs, tag = 'smem constant byte address 0x4 - core index']
  #allocation1 [shape = 'u32[144,128]{1,0:T(1,128)}', space=vmem, size = 0x12000, scoped, tag = 'internal scratch']
  %s0 = inlined_call_operand.vmem [shape: f32[2,8,256], index: 0, kind: input, shape index: {}]
  %s1 = inlined_call_operand.vmem [shape: f32[2,8,1], index: 1, kind: input, shape index: {}]
  %s2 = inlined_call_operand.vmem [shape: f32[4,8], index: 2, kind: input, shape index: {}]
  %s3 = inlined_call_operand.vmem [shape: f32[256,64], index: 3, kind: input, shape index: {}]
  %s4 = inlined_call_operand.hbm [shape: f32[4,128], index: 4, kind: output, shape index: {}]
  %s5 = sld [smem:[#allocation0]]
  $region26: #{tpu_custom_call.1} parent=0
    _
  %s7 = ssub.s32 1, %s5
  %s8 = scalar_select 0, %s7, %s5
  $region1: #{tpu_custom_call.1} parent=0
    #allocation2 [shape = 'u8[2048]{0}', space=vmem, size = 0x800, scoped, tag = 'output window, operand 0, single buffered']
    #allocation3 [shape = 's32[1]{0}', space=sflag, size = 0x4, scoped, tag = 'scoped memory for tpu_custom_call.1']
    %9 = vsyncpa [#allocation3], 0
    // Predicated region
    $region2: #{tpu_custom_call.1} parent=1 // pred_check
      _
    $region3: #{tpu_custom_call.1} parent=1 // pred_check_branch
      %11 = sbr.rel (0) target = $region5
    $region4: #{tpu_custom_call.1} parent=1 // pred_region
      _
    $region5: #{tpu_custom_call.1} parent=1 // pred_fallthru
      _
    // Predicated region
    $region6: #{tpu_custom_call.1} parent=1 // pred_check
      _
    $region7: #{tpu_custom_call.1} parent=1 // pred_check_branch
      %13 = sbr.rel (0) target = $region9
    $region8: #{tpu_custom_call.1} parent=1 // pred_region
      _
    $region9: #{tpu_custom_call.1} parent=1 // pred_fallthru
      _
    // Predicated region
    $region10: #{tpu_custom_call.1} parent=1 // pred_check
      _
    $region11: #{tpu_custom_call.1} parent=1 // pred_check_branch
      %15 = sbr.rel (0) target = $region13
    $region12: #{tpu_custom_call.1} parent=1 // pred_region
      _
    $region13: #{tpu_custom_call.1} parent=1 // pred_fallthru
      _
    // Predicated region
    $region14: #{tpu_custom_call.1} parent=1 // pred_check
      _
    $region15: #{tpu_custom_call.1} parent=1 // pred_check_branch
      %17 = sbr.rel (0) target = $region17
    $region16: #{tpu_custom_call.1} parent=1 // pred_region
      _
    $region17: #{tpu_custom_call.1} parent=1 // pred_fallthru
      _
    %v18 = vld [vmem:[%s0] sm:$0xff]
    %v19 = vld [vmem:[%s0 + $0x8] sm:$0xff]
    %v20 = vld [vmem:[%s0 + $0x10] sm:$0xff]
    %v21 = vld [vmem:[%s0 + $0x18] sm:$0xff]
    %v22 = vld [vmem:[%s1] sm:$0xff]
    %s23 = scalar_lea.vmem %s1, 8
    %v24 = vld [vmem:[%s23] sm:$0xff]
    %26 = vset.pattern.permute.xlu0 0
    %27 = vperm.xlu0 %26, %v22
    %v28 = vpop.permute.xlu0 %27
    %v30 = vmul.f32 %v18, %v28
    %v31 = vmul.f32 %v19, %v28
    %v32 = vmul.f32 %v20, %v28
    %v33 = vmul.f32 %v21, %v28
    %35 = vset.pattern.permute.xlu0 0
    %36 = vperm.xlu0 %35, %v24
    %v37 = vpop.permute.xlu0 %36
    %v39 = vadd.f32 %v30, %v37
    %v40 = vadd.f32 %v31, %v37
    %v41 = vadd.f32 %v32, %v37
    %v42 = vadd.f32 %v33, %v37
    %v43 = vmax.f32 %v39, 0.0
    %v44 = vmax.f32 %v40, 0.0
    %v45 = vmax.f32 %v41, 0.0
    %v46 = vmax.f32 %v42, 0.0
    %v47 = vld [vmem:[%s2] sm:$0xf]
    %v48 = vld [vmem:[%s3] sm:$0xff]
    %v49 = vld [vmem:[%s3 + $0x8] sm:$0xff]
    %v50 = vld [vmem:[%s3 + $0x10] sm:$0xff]
    %v51 = vld [vmem:[%s3 + $0x18] sm:$0xff]
    %v52 = vld [vmem:[%s3 + $0x20] sm:$0xff]
    %v53 = vld [vmem:[%s3 + $0x28] sm:$0xff]
    %v54 = vld [vmem:[%s3 + $0x30] sm:$0xff]
    %v55 = vld [vmem:[%s3 + $0x38] sm:$0xff]
    %v56 = vld [vmem:[%s3 + $0x40] sm:$0xff]
    %v57 = vld [vmem:[%s3 + $0x48] sm:$0xff]
    %v58 = vld [vmem:[%s3 + $0x50] sm:$0xff]
    %v59 = vld [vmem:[%s3 + $0x58] sm:$0xff]
    %v60 = vld [vmem:[%s3 + $0x60] sm:$0xff]
    %v61 = vld [vmem:[%s3 + $0x68] sm:$0xff]
    %v62 = vld [vmem:[%s3 + $0x70] sm:$0xff]
    %v63 = vld [vmem:[%s3 + $0x78] sm:$0xff]
    %v64 = vld [vmem:[%s3 + $0x80] sm:$0xff]
    %v65 = vld [vmem:[%s3 + $0x88] sm:$0xff]
    %v66 = vld [vmem:[%s3 + $0x90] sm:$0xff]
    %v67 = vld [vmem:[%s3 + $0x98] sm:$0xff]
    %v68 = vld [vmem:[%s3 + $0xa0] sm:$0xff]
    %v69 = vld [vmem:[%s3 + $0xa8] sm:$0xff]
    %v70 = vld [vmem:[%s3 + $0xb0] sm:$0xff]
    %v71 = vld [vmem:[%s3 + $0xb8] sm:$0xff]
    %v72 = vld [vmem:[%s3 + $0xc0] sm:$0xff]
    %v73 = vld [vmem:[%s3 + $0xc8] sm:$0xff]
    %v74 = vld [vmem:[%s3 + $0xd0] sm:$0xff]
    %v75 = vld [vmem:[%s3 + $0xd8] sm:$0xff]
    %v76 = vld [vmem:[%s3 + $0xe0] sm:$0xff]
    %v77 = vld [vmem:[%s3 + $0xe8] sm:$0xff]
    %v78 = vld [vmem:[%s3 + $0xf0] sm:$0xff]
    %v79 = vld [vmem:[%s3 + $0xf8] sm:$0xff]
    %vm80 = vcmask 64512
    %v82 = vsel %vm80, %v47, 0
    %84 = vmatprep.subr.mxu0 0.0
    %85 = vmatpush1.msra.mxu0 0.0
    %86 = vmatprep.subr.mxu0 0.0
    %87 = vmatpush1.msra.mxu0 0.0
    %88 = vmatprep.subr.mxu0 0.0
    %89 = vmatpush1.msra.mxu0 0.0
    %90 = vmatprep.subr.mxu0 0.0
    %91 = vmatpush1.msra.mxu0 0.0
    %92 = vmatprep.subr.mxu0 0.0
    %93 = vmatpush1.msra.mxu0 0.0
    %94 = vmatprep.subr.mxu0 0.0
    %95 = vmatpush1.msra.mxu0 0.0
    %96 = vmatprep.subr.mxu0 0.0
    %97 = vmatpush1.msra.mxu0 0.0
    %98 = vmatprep.subr.mxu0 0.0
    %99 = vmatpush1.msra.mxu0 0.0
    %100 = vmatprep.subr.mxu0 0.0
    %101 = vmatpush1.msra.mxu0 0.0
    %102 = vmatprep.subr.mxu0 0.0
    %103 = vmatpush1.msra.mxu0 0.0
    %104 = vmatprep.subr.mxu0 0.0
    %105 = vmatpush1.msra.mxu0 0.0
    %106 = vmatprep.subr.mxu0 0.0
    %107 = vmatpush1.msra.mxu0 0.0
    %108 = vmatprep.subr.mxu0 0.0
    %109 = vmatpush1.msra.mxu0 0.0
    %110 = vmatprep.subr.mxu0 0.0
    %111 = vmatpush1.msra.mxu0 0.0
    %112 = vmatprep.subr.mxu0 0.0
    %113 = vmatpush1.msra.mxu0 0.0
    %114 = vmatprep.subr.mxu0 %v44
    %115 = vmatpush1.msra.mxu0 %v43
    %116 = vmatprep.subr.mxu0 0.0
    %117 = vmatpush2.msra.mxu0 0.0
    %118 = vmatprep.subr.mxu0 0.0
    %119 = vmatpush2.msra.mxu0 0.0
    %120 = vmatprep.subr.mxu0 0.0
    %121 = vmatpush2.msra.mxu0 0.0
    %122 = vmatprep.subr.mxu0 0.0
    %123 = vmatpush2.msra.mxu0 0.0
    %124 = vmatprep.subr.mxu0 0.0
    %125 = vmatpush2.msra.mxu0 0.0
    %126 = vmatprep.subr.mxu0 0.0
    %127 = vmatpush2.msra.mxu0 0.0
    %128 = vmatprep.subr.mxu0 0.0
    %129 = vmatpush2.msra.mxu0 0.0
    %130 = vmatprep.subr.mxu0 0.0
    %131 = vmatpush2.msra.mxu0 0.0
    %132 = vmatprep.subr.mxu0 0.0
    %133 = vmatpush2.msra.mxu0 0.0
    %134 = vmatprep.subr.mxu0 0.0
    %135 = vmatpush2.msra.mxu0 0.0
    %136 = vmatprep.subr.mxu0 0.0
    %137 = vmatpush2.msra.mxu0 0.0
    %138 = vmatprep.subr.mxu0 0.0
    %139 = vmatpush2.msra.mxu0 0.0
    %140 = vmatprep.subr.mxu0 0.0
    %141 = vmatpush2.msra.mxu0 0.0
    %142 = vmatprep.subr.mxu0 0.0
    %143 = vmatpush2.msra.mxu0 0.0
    %144 = vmatprep.subr.mxu0 0.0
    %145 = vmatpush2.msra.mxu0 0.0
    %146 = vmatprep.subr.mxu0 0.0
    %147 = vmatpush2.msra.mxu0 0.0
    %148 = vmatprep.mubr.f32.mxu0 0.0
    %149 = vmatmul.mubr.f32.gmra.mxu0 %v82
    %v150 = vpop.f32.mrf.mxu0
    %v151 = vadd.f32 0.0, %v150
    %v152 = vpop.f32.mrf.mxu0
    %v153 = vadd.f32 0.0, %v152
    %154 = vdwg.mxu0
    %155 = vmatprep.subr.mxu0 0.0
    %156 = vmatpush1.msra.mxu0 %v63
    %157 = vmatprep.subr.mxu0 0.0
    %158 = vmatpush1.msra.mxu0 %v62
    %159 = vmatprep.subr.mxu0 0.0
    %160 = vmatpush1.msra.mxu0 %v61
    %161 = vmatprep.subr.mxu0 0.0
    %162 = vmatpush1.msra.mxu0 %v60
    %163 = vmatprep.subr.mxu0 0.0
    %164 = vmatpush1.msra.mxu0 %v59
    %165 = vmatprep.subr.mxu0 0.0
    %166 = vmatpush1.msra.mxu0 %v58
    %167 = vmatprep.subr.mxu0 0.0
    %168 = vmatpush1.msra.mxu0 %v57
    %169 = vmatprep.subr.mxu0 0.0
    %170 = vmatpush1.msra.mxu0 %v56
    %171 = vmatprep.subr.mxu0 0.0
    %172 = vmatpush1.msra.mxu0 %v55
    %173 = vmatprep.subr.mxu0 0.0
    %174 = vmatpush1.msra.mxu0 %v54
    %175 = vmatprep.subr.mxu0 0.0
    %176 = vmatpush1.msra.mxu0 %v53
    %177 = vmatprep.subr.mxu0 0.0
    %178 = vmatpush1.msra.mxu0 %v52
    %179 = vmatprep.subr.mxu0 0.0
    %180 = vmatpush1.msra.mxu0 %v51
    %181 = vmatprep.subr.mxu0 0.0
    %182 = vmatpush1.msra.mxu0 %v50
    %183 = vmatprep.subr.mxu0 0.0
    %184 = vmatpush1.msra.mxu0 %v49
    %185 = vmatprep.subr.mxu0 0.0
    %186 = vmatpush1.msra.mxu0 %v48
    %187 = vmatprep.subr.mxu0 0.0
    %188 = vmatpush2.msra.mxu0 %v79
    %189 = vmatprep.subr.mxu0 0.0
    %190 = vmatpush2.msra.mxu0 %v78
    %191 = vmatprep.subr.mxu0 0.0
    %192 = vmatpush2.msra.mxu0 %v77
    %193 = vmatprep.subr.mxu0 0.0
    %194 = vmatpush2.msra.mxu0 %v76
    %195 = vmatprep.subr.mxu0 0.0
    %196 = vmatpush2.msra.mxu0 %v75
    %197 = vmatprep.subr.mxu0 0.0
    %198 = vmatpush2.msra.mxu0 %v74
    %199 = vmatprep.subr.mxu0 0.0
    %200 = vmatpush2.msra.mxu0 %v73
    %201 = vmatprep.subr.mxu0 0.0
    %202 = vmatpush2.msra.mxu0 %v72
    %203 = vmatprep.subr.mxu0 0.0
    %204 = vmatpush2.msra.mxu0 %v71
    %205 = vmatprep.subr.mxu0 0.0
    %206 = vmatpush2.msra.mxu0 %v70
    %207 = vmatprep.subr.mxu0 0.0
    %208 = vmatpush2.msra.mxu0 %v69
    %209 = vmatprep.subr.mxu0 0.0
    %210 = vmatpush2.msra.mxu0 %v68
    %211 = vmatprep.subr.mxu0 0.0
    %212 = vmatpush2.msra.mxu0 %v67
    %213 = vmatprep.subr.mxu0 0.0
    %214 = vmatpush2.msra.mxu0 %v66
    %215 = vmatprep.subr.mxu0 0.0
    %216 = vmatpush2.msra.mxu0 %v65
    %217 = vmatprep.subr.mxu0 0.0
    %218 = vmatpush2.msra.mxu0 %v64
    %219 = vmatprep.mubr.f32.mxu0 %v153
    %220 = vmatmul.mubr.f32.gmra.mxu0 %v151
    %v221 = vpop.f32.mrf.mxu0
    %v222 = vadd.f32 0.0, %v221
    %v223 = vpop.f32.mrf.mxu0
    %224 = vdwg.mxu0
    %225 = vmatprep.subr.mxu0 0.0
    %226 = vmatpush1.msra.mxu0 0.0
    %227 = vmatprep.subr.mxu0 0.0
    %228 = vmatpush1.msra.mxu0 0.0
    %229 = vmatprep.subr.mxu0 0.0
    %230 = vmatpush1.msra.mxu0 0.0
    %231 = vmatprep.subr.mxu0 0.0
    %232 = vmatpush1.msra.mxu0 0.0
    %233 = vmatprep.subr.mxu0 0.0
    %234 = vmatpush1.msra.mxu0 0.0
    %235 = vmatprep.subr.mxu0 0.0
    %236 = vmatpush1.msra.mxu0 0.0
    %237 = vmatprep.subr.mxu0 0.0
    %238 = vmatpush1.msra.mxu0 0.0
    %239 = vmatprep.subr.mxu0 0.0
    %240 = vmatpush1.msra.mxu0 0.0
    %241 = vmatprep.subr.mxu0 0.0
    %242 = vmatpush1.msra.mxu0 0.0
    %243 = vmatprep.subr.mxu0 0.0
    %244 = vmatpush1.msra.mxu0 0.0
    %245 = vmatprep.subr.mxu0 0.0
    %246 = vmatpush1.msra.mxu0 0.0
    %247 = vmatprep.subr.mxu0 0.0
    %248 = vmatpush1.msra.mxu0 0.0
    %249 = vmatprep.subr.mxu0 0.0
    %250 = vmatpush1.msra.mxu0 0.0
    %251 = vmatprep.subr.mxu0 0.0
    %252 = vmatpush1.msra.mxu0 0.0
    %253 = vmatprep.subr.mxu0 0.0
    %254 = vmatpush1.msra.mxu0 0.0
    %255 = vmatprep.subr.mxu0 %v46
    %256 = vmatpush1.msra.mxu0 %v45
    %257 = vmatprep.subr.mxu0 0.0
    %258 = vmatpush2.msra.mxu0 0.0
    %259 = vmatprep.subr.mxu0 0.0
    %260 = vmatpush2.msra.mxu0 0.0
    %261 = vmatprep.subr.mxu0 0.0
    %262 = vmatpush2.msra.mxu0 0.0
    %263 = vmatprep.subr.mxu0 0.0
    %264 = vmatpush2.msra.mxu0 0.0
    %265 = vmatprep.subr.mxu0 0.0
    %266 = vmatpush2.msra.mxu0 0.0
    %267 = vmatprep.subr.mxu0 0.0
    %268 = vmatpush2.msra.mxu0 0.0
    %269 = vmatprep.subr.mxu0 0.0
    %270 = vmatpush2.msra.mxu0 0.0
    %271 = vmatprep.subr.mxu0 0.0
    %272 = vmatpush2.msra.mxu0 0.0
    %273 = vmatprep.subr.mxu0 0.0
    %274 = vmatpush2.msra.mxu0 0.0
    %275 = vmatprep.subr.mxu0 0.0
    %276 = vmatpush2.msra.mxu0 0.0
    %277 = vmatprep.subr.mxu0 0.0
    %278 = vmatpush2.msra.mxu0 0.0
    %279 = vmatprep.subr.mxu0 0.0
    %280 = vmatpush2.msra.mxu0 0.0
    %281 = vmatprep.subr.mxu0 0.0
    %282 = vmatpush2.msra.mxu0 0.0
    %283 = vmatprep.subr.mxu0 0.0
    %284 = vmatpush2.msra.mxu0 0.0
    %285 = vmatprep.subr.mxu0 0.0
    %286 = vmatpush2.msra.mxu0 0.0
    %287 = vmatprep.subr.mxu0 0.0
    %288 = vmatpush2.msra.mxu0 0.0
    %289 = vmatprep.mubr.f32.mxu0 0.0
    %290 = vmatmul.mubr.f32.gmra.mxu0 %v82
    %v291 = vpop.f32.mrf.mxu0
    %v292 = vadd.f32 0.0, %v291
    %v293 = vpop.f32.mrf.mxu0
    %v294 = vadd.f32 0.0, %v293
    %295 = vdwg.mxu0
    %296 = vmatprep.subr.mxu0 0.0
    %297 = vmatpush1.msra.mxu0 %v63
    %298 = vmatprep.subr.mxu0 0.0
    %299 = vmatpush1.msra.mxu0 %v62
    %300 = vmatprep.subr.mxu0 0.0
    %301 = vmatpush1.msra.mxu0 %v61
    %302 = vmatprep.subr.mxu0 0.0
    %303 = vmatpush1.msra.mxu0 %v60
    %304 = vmatprep.subr.mxu0 0.0
    %305 = vmatpush1.msra.mxu0 %v59
    %306 = vmatprep.subr.mxu0 0.0
    %307 = vmatpush1.msra.mxu0 %v58
    %308 = vmatprep.subr.mxu0 0.0
    %309 = vmatpush1.msra.mxu0 %v57
    %310 = vmatprep.subr.mxu0 0.0
    %311 = vmatpush1.msra.mxu0 %v56
    %312 = vmatprep.subr.mxu0 0.0
    %313 = vmatpush1.msra.mxu0 %v55
    %314 = vmatprep.subr.mxu0 0.0
    %315 = vmatpush1.msra.mxu0 %v54
    %316 = vmatprep.subr.mxu0 0.0
    %317 = vmatpush1.msra.mxu0 %v53
    %318 = vmatprep.subr.mxu0 0.0
    %319 = vmatpush1.msra.mxu0 %v52
    %320 = vmatprep.subr.mxu0 0.0
    %321 = vmatpush1.msra.mxu0 %v51
    %322 = vmatprep.subr.mxu0 0.0
    %323 = vmatpush1.msra.mxu0 %v50
    %324 = vmatprep.subr.mxu0 0.0
    %325 = vmatpush1.msra.mxu0 %v49
    %326 = vmatprep.subr.mxu0 0.0
    %327 = vmatpush1.msra.mxu0 %v48
    %328 = vmatprep.subr.mxu0 0.0
    %329 = vmatpush2.msra.mxu0 %v79
    %330 = vmatprep.subr.mxu0 0.0
    %331 = vmatpush2.msra.mxu0 %v78
    %332 = vmatprep.subr.mxu0 0.0
    %333 = vmatpush2.msra.mxu0 %v77
    %334 = vmatprep.subr.mxu0 0.0
    %335 = vmatpush2.msra.mxu0 %v76
    %336 = vmatprep.subr.mxu0 0.0
    %337 = vmatpush2.msra.mxu0 %v75
    %338 = vmatprep.subr.mxu0 0.0
    %339 = vmatpush2.msra.mxu0 %v74
    %340 = vmatprep.subr.mxu0 0.0
    %341 = vmatpush2.msra.mxu0 %v73
    %342 = vmatprep.subr.mxu0 0.0
    %343 = vmatpush2.msra.mxu0 %v72
    %344 = vmatprep.subr.mxu0 0.0
    %345 = vmatpush2.msra.mxu0 %v71
    %346 = vmatprep.subr.mxu0 0.0
    %347 = vmatpush2.msra.mxu0 %v70
    %348 = vmatprep.subr.mxu0 0.0
    %349 = vmatpush2.msra.mxu0 %v69
    %350 = vmatprep.subr.mxu0 0.0
    %351 = vmatpush2.msra.mxu0 %v68
    %352 = vmatprep.subr.mxu0 0.0
    %353 = vmatpush2.msra.mxu0 %v67
    %354 = vmatprep.subr.mxu0 0.0
    %355 = vmatpush2.msra.mxu0 %v66
    %356 = vmatprep.subr.mxu0 0.0
    %357 = vmatpush2.msra.mxu0 %v65
    %358 = vmatprep.subr.mxu0 0.0
    %359 = vmatpush2.msra.mxu0 %v64
    %360 = vmatprep.mubr.f32.mxu0 %v294
    %361 = vmatmul.mubr.f32.gmra.mxu0 %v292
    %v362 = vpop.f32.mrf.mxu0
    %v363 = vadd.f32 0.0, %v362
    %v364 = vpop.f32.mrf.mxu0
    %365 = vdwg.mxu0
    %367 = vrot.lane.b32.xlu0 %v363, 64
    %v368 = vpop.permute.xlu0 %367
    %vm370 = vcmask 523264
    %v371 = vsel %vm370, %v222, %v368
    %372 = vst [vmem:[#allocation2] sm:$0xf] %v371
    // Predicated region
    $region18: #{tpu_custom_call.1} parent=1 // pred_check
      _
    $region19: #{tpu_custom_call.1} parent=1 // pred_check_branch
      %374 = sbr.rel (0) target = $region21
    $region20: #{tpu_custom_call.1} parent=1 // pred_region
      %s376 = ssub.s32 64, 64
      %377 = vsyncadd [#allocation3], %s376
      %s379 = sshll.u32 [#allocation2], 4
      %s380 = int_to_ptr.vmem [resolvable:$true] %s379
      %382 = dma.vmem_to_hbm [thread:$0]  %s380, 64, %s4, [#allocation3]
    $region21: #{tpu_custom_call.1} parent=1 // pred_fallthru
      _
    // Predicated region
    $region22: #{tpu_custom_call.1} parent=1 // pred_check
      _
    $region23: #{tpu_custom_call.1} parent=1 // pred_check_branch
      %384 = sbr.rel (0) target = $region25
    $region24: #{tpu_custom_call.1} parent=1 // pred_region
      %385 = dma.done [#allocation3], 64
    $region25: #{tpu_custom_call.1} parent=1 // pred_fallthru
      _
    %386 = vsyncpa [#allocation3], 1

</llo_original>
